<compile_context>
chip_gen: v7x
topology: tpu7x:2x2x1
jax: 0.10.0
libtpu: 0.0.40
codegen_flags: <defaults>
</compile_context>

<pallas_src>
import functools
import math

import jax
import jax.numpy as jnp
from jax import lax
from jax.experimental import pallas as pl
from jax.experimental.pallas import tpu as pltpu


_NEG_BIG = -1e30  # finite "minus infinity" for additive masking (no inf-inf NaNs)


def _round_up(x, m):
    return ((x + m - 1) // m) * m


# ----------------------------------------------------------------------------
# Fused kernel: lin1+relu -> num_layers x (AGNNConv+relu) -> lin2+log_softmax
# Single grid point; every operand lives whole in VMEM at these sizes.
# ----------------------------------------------------------------------------
def _agnn_fused_kernel(x_ref, w1_ref, b1_ref, bias_ref, w2_ref, b2_ref,
                       betas_ref, o_ref, *, num_layers):
    f32 = jnp.float32
    bf16 = jnp.bfloat16

    # ---- lin1 + relu (MXU operands bf16, f32 accumulation) ----
    h = jnp.dot(x_ref[...].astype(bf16), w1_ref[...].astype(bf16),
                preferred_element_type=f32) + b1_ref[...]
    h = jnp.maximum(h, 0.0)

    # additive attention mask: 0 on (self-)edges, -1e30 elsewhere
    bias = bias_ref[...]

    for layer in range(num_layers):
        beta = betas_ref[layer]                            # scalar from SMEM

        # L2 row-normalization (matches F.normalize eps) via one EUP rsqrt.
        sumsq = jnp.sum(h * h, axis=-1, keepdims=True)
        inv_norm = lax.rsqrt(jnp.maximum(sumsq, 1e-24))

        # Fold beta into the lhs operand: O(N*H) multiplies, not O(N*N).
        q = (h * (inv_norm * beta)).astype(bf16)
        k = (h * inv_norm).astype(bf16)

        # S = beta * xn @ xn.T as a last-dim contraction (no explicit transpose).
        s = lax.dot_general(q, k,
                            dimension_numbers=(((1,), (1,)), ((), ())),
                            preferred_element_type=f32)
        s = s + bias

        # Masked row softmax over incoming edges; normalize AFTER the matmul.
        rowmax = jnp.max(s, axis=-1, keepdims=True)
        p = jnp.exp(s - rowmax)                            # masked entries -> 0
        denom = jnp.sum(p, axis=-1, keepdims=True)         # >= 1 (self-loops)

        out = jnp.dot(p.astype(bf16), h.astype(bf16), preferred_element_type=f32)
        h = jnp.maximum(out * pl.reciprocal(denom, approx=True), 0.0)

    # ---- lin2 + log_softmax ----
    # Padded output lanes carry b2 = -1e30 -> exp underflows to 0, so the lse
    # (and hence the log_softmax over real classes) is exact.
    y = jnp.dot(h.astype(bf16), w2_ref[...].astype(bf16),
                preferred_element_type=f32) + b2_ref[...]
    m = jnp.max(y, axis=-1, keepdims=True)
    z = y - m
    lse = jnp.log(jnp.sum(jnp.exp(z), axis=-1, keepdims=True))
    o_ref[...] = z - lse


# ----------------------------------------------------------------------------
# Wrapper
# ----------------------------------------------------------------------------

_VMEM = pl.BlockSpec(memory_space=pltpu.MemorySpace.VMEM)
_SMEM = pl.BlockSpec(memory_space=pltpu.MemorySpace.SMEM)


@functools.partial(jax.jit, static_argnames=("num_nodes", "num_layers"))
def agnn_forward(edge_index, features, params, num_nodes, num_layers):
    n, f_in = features.shape
    hid = params["w1"].shape[1]
    n_out = params["w2"].shape[1]

    # Lane-dense padding: every lane (last) dim -> multiple of 128; node dim ->
    # multiple of 8 (sublane). Padded nodes only get a self-loop, so their h
    # stays 0 and they never influence real rows.
    n_pad = _round_up(max(n, 8), 8)
    f_pad = _round_up(f_in, 128)
    h_pad = _round_up(hid, 128)
    o_pad = _round_up(n_out, 128)

    x_p = jnp.zeros((n_pad, f_pad), jnp.float32).at[:n, :f_in].set(features)
    w1_p = jnp.zeros((f_pad, h_pad), jnp.float32).at[:f_in, :hid].set(params["w1"])
    b1_p = jnp.zeros((1, h_pad), jnp.float32).at[:, :hid].set(params["b1"])
    w2_p = jnp.zeros((h_pad, o_pad), jnp.float32).at[:hid, :n_out].set(params["w2"])
    b2_p = jnp.full((1, o_pad), _NEG_BIG, jnp.float32).at[:, :n_out].set(params["b2"])

    # Additive attention bias: 0 where edge src->dst or self-loop, else -1e30.
    # (Dense scatter glue stays in plain JAX; PyG AGNNConv adds self-loops.)
    src, dst = edge_index[0], edge_index[1]
    bias = jnp.full((n_pad, n_pad), _NEG_BIG, jnp.float32)
    bias = bias.at[dst, src].set(0.0)
    diag = jnp.arange(n_pad)
    bias = bias.at[diag, diag].set(0.0)

    betas = params["betas"].astype(jnp.float32)            # [num_layers] -> SMEM

    flops = (2 * n_pad * f_pad * h_pad
             + num_layers * (4 * n_pad * n_pad * h_pad)
             + 2 * n_pad * h_pad * o_pad)
    transcendentals = num_layers * (n_pad * n_pad + 2 * n_pad) + n_pad * o_pad
    bytes_accessed = 4 * (x_p.size + w1_p.size + b1_p.size + bias.size
                          + w2_p.size + b2_p.size + n_pad * o_pad + num_layers)

    kernel = functools.partial(_agnn_fused_kernel, num_layers=num_layers)
    out_p = pl.pallas_call(
        kernel,
        out_shape=jax.ShapeDtypeStruct((n_pad, o_pad), jnp.float32),
        in_specs=[_VMEM, _VMEM, _VMEM, _VMEM, _VMEM, _VMEM, _SMEM],
        out_specs=_VMEM,
        cost_estimate=pl.CostEstimate(flops=flops,
                                      transcendentals=transcendentals,
                                      bytes_accessed=bytes_accessed),
    )(x_p, w1_p, b1_p, bias, w2_p, b2_p, betas)

    return out_p[:n, :n_out]


# ----------------------------------------------------------------------------
# Deterministic parameter init (nn.Linear-style uniform; AGNNConv beta = 1.0)
# ----------------------------------------------------------------------------
def init_params(key, in_size, hid_size, out_size, num_layers):
    k1, k2, k3, k4 = jax.random.split(key, 4)
    bound1 = 1.0 / math.sqrt(in_size)
    bound2 = 1.0 / math.sqrt(hid_size)
    return {
        # stored already transposed to [in, out] so the kernel does x @ W
        "w1": jax.random.uniform(k1, (in_size, hid_size), jnp.float32, -bound1, bound1),
        "b1": jax.random.uniform(k2, (1, hid_size), jnp.float32, -bound1, bound1),
        "w2": jax.random.uniform(k3, (hid_size, out_size), jnp.float32, -bound2, bound2),
        "b2": jax.random.uniform(k4, (1, out_size), jnp.float32, -bound2, bound2),
        # AGNNConv(requires_grad=True) initializes beta to 1.0
        "betas": jnp.ones((num_layers,), jnp.float32),
    }


# ----------------------------------------------------------------------------
# Main
# ----------------------------------------------------------------------------
if __name__ == "__main__":
    key = jax.random.PRNGKey(0)
    k_feat, k_edge, k_param = jax.random.split(key, 3)

    num_nodes = 16
    in_size, hid_size, out_size, num_layers = 32, 32, 8, 2
    num_edges = 48

    # random directed edges [2, E]: row 0 = src, row 1 = dst
    edge_index = jax.random.randint(k_edge, (2, num_edges), 0, num_nodes, jnp.int32)
    features = jax.random.normal(k_feat, (num_nodes, in_size), jnp.float32)

    params = init_params(k_param, in_size, hid_size, out_size, num_layers)

    out = agnn_forward(edge_index, features, params, num_nodes, num_layers)
    out = jax.block_until_ready(out)

    assert out.shape == (num_nodes, out_size)
    assert bool(jnp.all(jnp.isfinite(out)))
    # log_softmax invariant: rows of exp(out) sum to 1
    row_sums = jnp.sum(jnp.exp(out), axis=1)
    assert bool(jnp.all(jnp.abs(row_sums - 1.0) < 1e-3))
    print("KERNEL_OK")
</pallas_src>

<mosaic_0001>
module attributes {stable_mosaic.version = 11 : i64} {
  func.func @_agnn_fused_kernel(%arg0: memref<16x128xf32, #tpu.memory_space<vmem>>, %arg1: memref<128x128xf32, #tpu.memory_space<vmem>>, %arg2: memref<1x128xf32, #tpu.memory_space<vmem>>, %arg3: memref<16x16xf32, #tpu.memory_space<vmem>>, %arg4: memref<128x128xf32, #tpu.memory_space<vmem>>, %arg5: memref<1x128xf32, #tpu.memory_space<vmem>>, %arg6: memref<2xf32, #tpu.memory_space<smem>>, %arg7: memref<16x128xf32, #tpu.memory_space<vmem>>) attributes {dimension_semantics = [], scalar_prefetch = 0 : i64, scratch_operands = 0 : i64, tpu.core_type = #tpu.core_type<tc>} {
    %c0 = arith.constant 0 : index
    %c0_0 = arith.constant 0 : index
    %0 = vector.load %arg0[%c0, %c0_0] : memref<16x128xf32, #tpu.memory_space<vmem>>, vector<16x128xf32>
    %1 = arith.truncf %0 : vector<16x128xf32> to vector<16x128xbf16>
    %c0_1 = arith.constant 0 : index
    %c0_2 = arith.constant 0 : index
    %2 = vector.load %arg1[%c0_1, %c0_2] : memref<128x128xf32, #tpu.memory_space<vmem>>, vector<128x128xf32>
    %3 = arith.truncf %2 : vector<128x128xf32> to vector<128x128xbf16>
    %cst = arith.constant dense<0.000000e+00> : vector<16x128xf32>
    %4 = tpu.matmul %1, %3, %cst {dimension_numbers = #tpu.dot_dimension_numbers<[1], [0], [0], [1], [0, 0, 1, 1], [], []>} : vector<16x128xbf16>, vector<128x128xbf16>, vector<16x128xf32> -> vector<16x128xf32>
    %c0_3 = arith.constant 0 : index
    %c0_4 = arith.constant 0 : index
    %5 = vector.load %arg2[%c0_3, %c0_4] : memref<1x128xf32, #tpu.memory_space<vmem>>, vector<1x128xf32>
    %6 = vector.broadcast %5 : vector<1x128xf32> to vector<16x128xf32>
    %7 = arith.addf %4, %6 : vector<16x128xf32>
    %cst_5 = arith.constant 0.000000e+00 : f32
    %8 = vector.broadcast %cst_5 : f32 to vector<16x128xf32>
    %9 = arith.maximumf %7, %8 : vector<16x128xf32>
    %c0_6 = arith.constant 0 : index
    %c0_7 = arith.constant 0 : index
    %10 = vector.load %arg3[%c0_6, %c0_7] : memref<16x16xf32, #tpu.memory_space<vmem>>, vector<16x16xf32>
    %c0_8 = arith.constant 0 : index
    %11 = memref.load %arg6[%c0_8] : memref<2xf32, #tpu.memory_space<smem>>
    %12 = arith.mulf %9, %9 : vector<16x128xf32>
    %cst_9 = arith.constant dense<0.000000e+00> : vector<16xf32>
    %13 = vector.multi_reduction <add>, %12, %cst_9 [1] : vector<16x128xf32> to vector<16xf32>
    %14 = vector.shape_cast %13 : vector<16xf32> to vector<16x1xf32>
    %cst_10 = arith.constant 1.000000e-24 : f32
    %15 = vector.broadcast %cst_10 : f32 to vector<16x1xf32>
    %16 = arith.maximumf %14, %15 : vector<16x1xf32>
    %17 = math.rsqrt %16 : vector<16x1xf32>
    %18 = vector.broadcast %11 : f32 to vector<16x1xf32>
    %19 = arith.mulf %17, %18 : vector<16x1xf32>
    %20 = vector.broadcast %19 : vector<16x1xf32> to vector<16x128xf32>
    %21 = arith.mulf %9, %20 : vector<16x128xf32>
    %22 = arith.truncf %21 : vector<16x128xf32> to vector<16x128xbf16>
    %23 = vector.broadcast %17 : vector<16x1xf32> to vector<16x128xf32>
    %24 = arith.mulf %9, %23 : vector<16x128xf32>
    %25 = arith.truncf %24 : vector<16x128xf32> to vector<16x128xbf16>
    %cst_11 = arith.constant dense<0.000000e+00> : vector<16x16xf32>
    %26 = tpu.matmul %22, %25, %cst_11 {dimension_numbers = #tpu.dot_dimension_numbers<[1], [1], [0], [0], [0, 0, 1, 0], [], []>} : vector<16x128xbf16>, vector<16x128xbf16>, vector<16x16xf32> -> vector<16x16xf32>
    %27 = arith.addf %26, %10 : vector<16x16xf32>
    %cst_12 = arith.constant dense<0xFF800000> : vector<16xf32>
    %28 = vector.multi_reduction <maximumf>, %27, %cst_12 [1] : vector<16x16xf32> to vector<16xf32>
    %29 = vector.shape_cast %28 : vector<16xf32> to vector<16x1xf32>
    %30 = vector.broadcast %29 : vector<16x1xf32> to vector<16x16xf32>
    %31 = arith.subf %27, %30 : vector<16x16xf32>
    %32 = math.exp %31 : vector<16x16xf32>
    %cst_13 = arith.constant dense<0.000000e+00> : vector<16xf32>
    %33 = vector.multi_reduction <add>, %32, %cst_13 [1] : vector<16x16xf32> to vector<16xf32>
    %34 = vector.shape_cast %33 : vector<16xf32> to vector<16x1xf32>
    %35 = arith.truncf %32 : vector<16x16xf32> to vector<16x16xbf16>
    %36 = arith.truncf %9 : vector<16x128xf32> to vector<16x128xbf16>
    %cst_14 = arith.constant dense<0.000000e+00> : vector<16x128xf32>
    %37 = tpu.matmul %35, %36, %cst_14 {dimension_numbers = #tpu.dot_dimension_numbers<[1], [0], [0], [1], [0, 0, 1, 1], [], []>} : vector<16x16xbf16>, vector<16x128xbf16>, vector<16x128xf32> -> vector<16x128xf32>
    %38 = tpu.reciprocal %34 {approx = true} : vector<16x1xf32> -> vector<16x1xf32>
    %39 = vector.broadcast %38 : vector<16x1xf32> to vector<16x128xf32>
    %40 = arith.mulf %37, %39 : vector<16x128xf32>
    %cst_15 = arith.constant 0.000000e+00 : f32
    %41 = vector.broadcast %cst_15 : f32 to vector<16x128xf32>
    %42 = arith.maximumf %40, %41 : vector<16x128xf32>
    %c1 = arith.constant 1 : index
    %43 = memref.load %arg6[%c1] : memref<2xf32, #tpu.memory_space<smem>>
    %44 = arith.mulf %42, %42 : vector<16x128xf32>
    %cst_16 = arith.constant dense<0.000000e+00> : vector<16xf32>
    %45 = vector.multi_reduction <add>, %44, %cst_16 [1] : vector<16x128xf32> to vector<16xf32>
    %46 = vector.shape_cast %45 : vector<16xf32> to vector<16x1xf32>
    %cst_17 = arith.constant 1.000000e-24 : f32
    %47 = vector.broadcast %cst_17 : f32 to vector<16x1xf32>
    %48 = arith.maximumf %46, %47 : vector<16x1xf32>
    %49 = math.rsqrt %48 : vector<16x1xf32>
    %50 = vector.broadcast %43 : f32 to vector<16x1xf32>
    %51 = arith.mulf %49, %50 : vector<16x1xf32>
    %52 = vector.broadcast %51 : vector<16x1xf32> to vector<16x128xf32>
    %53 = arith.mulf %42, %52 : vector<16x128xf32>
    %54 = arith.truncf %53 : vector<16x128xf32> to vector<16x128xbf16>
    %55 = vector.broadcast %49 : vector<16x1xf32> to vector<16x128xf32>
    %56 = arith.mulf %42, %55 : vector<16x128xf32>
    %57 = arith.truncf %56 : vector<16x128xf32> to vector<16x128xbf16>
    %cst_18 = arith.constant dense<0.000000e+00> : vector<16x16xf32>
    %58 = tpu.matmul %54, %57, %cst_18 {dimension_numbers = #tpu.dot_dimension_numbers<[1], [1], [0], [0], [0, 0, 1, 0], [], []>} : vector<16x128xbf16>, vector<16x128xbf16>, vector<16x16xf32> -> vector<16x16xf32>
    %59 = arith.addf %58, %10 : vector<16x16xf32>
    %cst_19 = arith.constant dense<0xFF800000> : vector<16xf32>
    %60 = vector.multi_reduction <maximumf>, %59, %cst_19 [1] : vector<16x16xf32> to vector<16xf32>
    %61 = vector.shape_cast %60 : vector<16xf32> to vector<16x1xf32>
    %62 = vector.broadcast %61 : vector<16x1xf32> to vector<16x16xf32>
    %63 = arith.subf %59, %62 : vector<16x16xf32>
    %64 = math.exp %63 : vector<16x16xf32>
    %cst_20 = arith.constant dense<0.000000e+00> : vector<16xf32>
    %65 = vector.multi_reduction <add>, %64, %cst_20 [1] : vector<16x16xf32> to vector<16xf32>
    %66 = vector.shape_cast %65 : vector<16xf32> to vector<16x1xf32>
    %67 = arith.truncf %64 : vector<16x16xf32> to vector<16x16xbf16>
    %68 = arith.truncf %42 : vector<16x128xf32> to vector<16x128xbf16>
    %cst_21 = arith.constant dense<0.000000e+00> : vector<16x128xf32>
    %69 = tpu.matmul %67, %68, %cst_21 {dimension_numbers = #tpu.dot_dimension_numbers<[1], [0], [0], [1], [0, 0, 1, 1], [], []>} : vector<16x16xbf16>, vector<16x128xbf16>, vector<16x128xf32> -> vector<16x128xf32>
    %70 = tpu.reciprocal %66 {approx = true} : vector<16x1xf32> -> vector<16x1xf32>
    %71 = vector.broadcast %70 : vector<16x1xf32> to vector<16x128xf32>
    %72 = arith.mulf %69, %71 : vector<16x128xf32>
    %cst_22 = arith.constant 0.000000e+00 : f32
    %73 = vector.broadcast %cst_22 : f32 to vector<16x128xf32>
    %74 = arith.maximumf %72, %73 : vector<16x128xf32>
    %75 = arith.truncf %74 : vector<16x128xf32> to vector<16x128xbf16>
    %c0_23 = arith.constant 0 : index
    %c0_24 = arith.constant 0 : index
    %76 = vector.load %arg4[%c0_23, %c0_24] : memref<128x128xf32, #tpu.memory_space<vmem>>, vector<128x128xf32>
    %77 = arith.truncf %76 : vector<128x128xf32> to vector<128x128xbf16>
    %cst_25 = arith.constant dense<0.000000e+00> : vector<16x128xf32>
    %78 = tpu.matmul %75, %77, %cst_25 {dimension_numbers = #tpu.dot_dimension_numbers<[1], [0], [0], [1], [0, 0, 1, 1], [], []>} : vector<16x128xbf16>, vector<128x128xbf16>, vector<16x128xf32> -> vector<16x128xf32>
    %c0_26 = arith.constant 0 : index
    %c0_27 = arith.constant 0 : index
    %79 = vector.load %arg5[%c0_26, %c0_27] : memref<1x128xf32, #tpu.memory_space<vmem>>, vector<1x128xf32>
    %80 = vector.broadcast %79 : vector<1x128xf32> to vector<16x128xf32>
    %81 = arith.addf %78, %80 : vector<16x128xf32>
    %cst_28 = arith.constant dense<0xFF800000> : vector<16xf32>
    %82 = vector.multi_reduction <maximumf>, %81, %cst_28 [1] : vector<16x128xf32> to vector<16xf32>
    %83 = vector.shape_cast %82 : vector<16xf32> to vector<16x1xf32>
    %84 = vector.broadcast %83 : vector<16x1xf32> to vector<16x128xf32>
    %85 = arith.subf %81, %84 : vector<16x128xf32>
    %86 = math.exp %85 : vector<16x128xf32>
    %cst_29 = arith.constant dense<0.000000e+00> : vector<16xf32>
    %87 = vector.multi_reduction <add>, %86, %cst_29 [1] : vector<16x128xf32> to vector<16xf32>
    %88 = vector.shape_cast %87 : vector<16xf32> to vector<16x1xf32>
    %89 = math.log %88 : vector<16x1xf32>
    %90 = vector.broadcast %89 : vector<16x1xf32> to vector<16x128xf32>
    %91 = arith.subf %85, %90 : vector<16x128xf32>
    %c0_30 = arith.constant 0 : index
    %c0_31 = arith.constant 0 : index
    %92 = vector.load %arg7[%c0_30, %c0_31] : memref<16x128xf32, #tpu.memory_space<vmem>>, vector<16x128xf32>
    tpu.vector_store %arg7[%c0_30, %c0_31], %91 {strides = array<i32>} : memref<16x128xf32, #tpu.memory_space<vmem>>, vector<16x128xf32>,
    return
  }
}

</mosaic_0001>

<llo_original>
// kernel: agnn_forward.1
$region0: #{agnn_forward.1}
  #allocation0 [shape = 'u32[]', space=smem, size = 0x4, offset = 0x4, fixed_abs, tag = 'smem constant byte address 0x4 - core index']
  #allocation1 [shape = 'u32[144,128]{1,0:T(1,128)}', space=vmem, size = 0x12000, scoped, tag = 'internal scratch']
  %s0 = inlined_call_operand.vmem [shape: f32[16,128], index: 0, kind: input, shape index: {}]
  %s1 = inlined_call_operand.vmem [shape: f32[128,128], index: 1, kind: input, shape index: {}]
  %s2 = inlined_call_operand.vmem [shape: f32[1,128], index: 2, kind: input, shape index: {}]
  %s3 = inlined_call_operand.vmem [shape: f32[16,16], index: 3, kind: input, shape index: {}]
  %s4 = inlined_call_operand.vmem [shape: f32[128,128], index: 4, kind: input, shape index: {}]
  %s5 = inlined_call_operand.vmem [shape: f32[1,128], index: 5, kind: input, shape index: {}]
  %s6 = inlined_call_operand.vmem [shape: f32[2], index: 6, kind: input, shape index: {}]
  %s7 = inlined_call_operand.vmem [shape: f32[16,128], index: 7, kind: output, shape index: {}]
  %s8 = sld [smem:[#allocation0]]
  $region42: #{agnn_forward.1} parent=0
    _
  %s10 = ssub.s32 1, %s8
  %s11 = scalar_select 0, %s10, %s8
  $region1: #{agnn_forward.1} parent=0
    #allocation2 [shape = 'u8[512]{0}', space=smem, size = 0x200, scoped, tag = 'input window, operand 6, single buffered']
    #allocation3 [shape = 's32[1]{0}', space=sflag, size = 0x4, scoped, tag = 'scoped memory for agnn_forward.1']
    %12 = vsyncpa [#allocation3], 0
    // Predicated region
    $region2: #{agnn_forward.1} parent=1 // pred_check
      _
    $region3: #{agnn_forward.1} parent=1 // pred_check_branch
      %14 = sbr.rel (0) target = $region5
    $region4: #{agnn_forward.1} parent=1 // pred_region
      _
    $region5: #{agnn_forward.1} parent=1 // pred_fallthru
      _
    // Predicated region
    $region6: #{agnn_forward.1} parent=1 // pred_check
      _
    $region7: #{agnn_forward.1} parent=1 // pred_check_branch
      %16 = sbr.rel (0) target = $region9
    $region8: #{agnn_forward.1} parent=1 // pred_region
      _
    $region9: #{agnn_forward.1} parent=1 // pred_fallthru
      _
    // Predicated region
    $region10: #{agnn_forward.1} parent=1 // pred_check
      _
    $region11: #{agnn_forward.1} parent=1 // pred_check_branch
      %18 = sbr.rel (0) target = $region13
    $region12: #{agnn_forward.1} parent=1 // pred_region
      _
    $region13: #{agnn_forward.1} parent=1 // pred_fallthru
      _
    // Predicated region
    $region14: #{agnn_forward.1} parent=1 // pred_check
      _
    $region15: #{agnn_forward.1} parent=1 // pred_check_branch
      %20 = sbr.rel (0) target = $region17
    $region16: #{agnn_forward.1} parent=1 // pred_region
      _
    $region17: #{agnn_forward.1} parent=1 // pred_fallthru
      _
    // Predicated region
    $region18: #{agnn_forward.1} parent=1 // pred_check
      _
    $region19: #{agnn_forward.1} parent=1 // pred_check_branch
      %22 = sbr.rel (0) target = $region21
    $region20: #{agnn_forward.1} parent=1 // pred_region
      _
    $region21: #{agnn_forward.1} parent=1 // pred_fallthru
      _
    // Predicated region
    $region22: #{agnn_forward.1} parent=1 // pred_check
      _
    $region23: #{agnn_forward.1} parent=1 // pred_check_branch
      %24 = sbr.rel (0) target = $region25
    $region24: #{agnn_forward.1} parent=1 // pred_region
      _
    $region25: #{agnn_forward.1} parent=1 // pred_fallthru
      _
    // Predicated region
    $region26: #{agnn_forward.1} parent=1 // pred_check
      _
    $region27: #{agnn_forward.1} parent=1 // pred_check_branch
      %26 = sbr.rel (0) target = $region29
    $region28: #{agnn_forward.1} parent=1 // pred_region
      %s28 = ssub.s32 16, 16
      %29 = vsyncadd [#allocation3], %s28
      %s31 = sshll.u32 %s6, 4
      %s32 = int_to_ptr.vmem [resolvable:$true] %s31
      %34 = dma.vmem_to_smem %s32, 16, [#allocation2], [#allocation3]
    $region29: #{agnn_forward.1} parent=1 // pred_fallthru
      _
    // Predicated region
    $region30: #{agnn_forward.1} parent=1 // pred_check
      _
    $region31: #{agnn_forward.1} parent=1 // pred_check_branch
      %36 = sbr.rel (0) target = $region33
    $region32: #{agnn_forward.1} parent=1 // pred_region
      %37 = dma.done [#allocation3], 16
    $region33: #{agnn_forward.1} parent=1 // pred_fallthru
      _
    %38 = sfence
    %v40 = vld [vmem:[%s0] sm:$0xff]
    %v41 = vld [vmem:[%s0 + $0x8] sm:$0xff]
    %v42 = vpack.c.bf16 %v41, %v40
    %v43 = vld [vmem:[%s1] sm:$0xff]
    %v44 = vld [vmem:[%s1 + $0x8] sm:$0xff]
    %v45 = vld [vmem:[%s1 + $0x10] sm:$0xff]
    %v46 = vld [vmem:[%s1 + $0x18] sm:$0xff]
    %v47 = vld [vmem:[%s1 + $0x20] sm:$0xff]
    %v48 = vld [vmem:[%s1 + $0x28] sm:$0xff]
    %v49 = vld [vmem:[%s1 + $0x30] sm:$0xff]
    %v50 = vld [vmem:[%s1 + $0x38] sm:$0xff]
    %v51 = vld [vmem:[%s1 + $0x40] sm:$0xff]
    %v52 = vld [vmem:[%s1 + $0x48] sm:$0xff]
    %v53 = vld [vmem:[%s1 + $0x50] sm:$0xff]
    %v54 = vld [vmem:[%s1 + $0x58] sm:$0xff]
    %v55 = vld [vmem:[%s1 + $0x60] sm:$0xff]
    %v56 = vld [vmem:[%s1 + $0x68] sm:$0xff]
    %v57 = vld [vmem:[%s1 + $0x70] sm:$0xff]
    %v58 = vld [vmem:[%s1 + $0x78] sm:$0xff]
    %v59 = vpack.c.bf16 %v44, %v43
    %v60 = vpack.c.bf16 %v46, %v45
    %v61 = vpack.c.bf16 %v48, %v47
    %v62 = vpack.c.bf16 %v50, %v49
    %v63 = vpack.c.bf16 %v52, %v51
    %v64 = vpack.c.bf16 %v54, %v53
    %v65 = vpack.c.bf16 %v56, %v55
    %v66 = vpack.c.bf16 %v58, %v57
    %v67 = vld [vmem:[%s2] sm:$0x1]
    %v69 = vlaneseq
    %v70 = vshrl.u32 %v69, 7
    %v71 = vsub.s32 0, %v70
    %v72 = vrot.slane %v67, %v71
    %74 = vmatprep.subr.bf16.mxu0 0
    %75 = vmatpush1.bf16.msra.mxu0 %v59
    %76 = vmatprep.subr.bf16.mxu0 0
    %77 = vmatpush1.bf16.msra.mxu0 %v60
    %78 = vmatprep.subr.bf16.mxu0 0
    %79 = vmatpush1.bf16.msra.mxu0 %v61
    %80 = vmatprep.subr.bf16.mxu0 0
    %81 = vmatpush1.bf16.msra.mxu0 %v62
    %82 = vmatprep.subr.bf16.mxu0 0
    %83 = vmatpush1.bf16.msra.mxu0 %v63
    %84 = vmatprep.subr.bf16.mxu0 0
    %85 = vmatpush1.bf16.msra.mxu0 %v64
    %86 = vmatprep.subr.bf16.mxu0 0
    %87 = vmatpush1.bf16.msra.mxu0 %v65
    %88 = vmatprep.subr.bf16.mxu0 0
    %89 = vmatpush1.bf16.msra.mxu0 %v66
    %90 = vmatprep.subr.bf16.mxu0 0
    %91 = vmatpush1.bf16.msra.mxu0 0
    %92 = vmatprep.subr.bf16.mxu0 0
    %93 = vmatpush1.bf16.msra.mxu0 0
    %94 = vmatprep.subr.bf16.mxu0 0
    %95 = vmatpush1.bf16.msra.mxu0 0
    %96 = vmatprep.subr.bf16.mxu0 0
    %97 = vmatpush1.bf16.msra.mxu0 0
    %98 = vmatprep.subr.bf16.mxu0 0
    %99 = vmatpush1.bf16.msra.mxu0 0
    %100 = vmatprep.subr.bf16.mxu0 0
    %101 = vmatpush1.bf16.msra.mxu0 0
    %102 = vmatprep.subr.bf16.mxu0 0
    %103 = vmatpush1.bf16.msra.mxu0 0
    %104 = vmatprep.subr.bf16.mxu0 0
    %105 = vmatpush1.bf16.msra.mxu0 0
    %106 = vmatprep.mubr.bf16.mxu0 0
    %107 = vmatmul.mubr.bf16.gmra.mrb[0].mxu0 %v42
    %v108 = vpop.f32.mrb[0].mxu0
    %v109 = vadd.f32 %v72, %v108
    %v110 = vpop.f32.mrb[0].mxu0
    %v111 = vpop.f32.mrb[0].mxu0
    %v112 = vadd.f32 %v72, %v111
    %v113 = vpop.f32.mrb[0].mxu0
    %114 = vdwg.mxu0
    %v115 = vmax.f32 %v109, 0.0
    %v116 = vmax.f32 %v112, 0.0
    %v117 = vld [vmem:[%s3] sm:$0xff]
    %v118 = vld [vmem:[%s3 + $0x8] sm:$0xff]
    %s119 = sld [smem:[#allocation2]]
    %v120 = vmul.f32 %v115, %v115
    %v121 = vmul.f32 %v116, %v116
    %122 = vadd.xlane.f32.xlu0 %v120
    %v123 = vpop.xlane.xlu0 %122
    %124 = vadd.xlane.f32.xlu0 %v121
    %v125 = vpop.xlane.xlu0 %124
    %v126 = vmax.f32 %v123, 1e-24
    %v127 = vmax.f32 %v125, 1e-24
    %v128 = vrsqrt.pop %v126
    %v129 = vrsqrt.pop %v127
    %v130 = vstv %s119
    %v131 = vmul.f32 %v128, %v130
    %v132 = vmul.f32 %v129, %v130
    %v133 = vmul.f32 %v115, %v131
    %v134 = vmul.f32 %v116, %v132
    %v135 = vpack.c.bf16 %v134, %v133
    %v136 = vmul.f32 %v115, %v128
    %v137 = vmul.f32 %v116, %v129
    %v138 = vpack.c.bf16 %v137, %v136
    %139 = vmatprep.subr.bf16.mxu0 0
    %140 = vmatpush1.bf16.xpose.msra.mxu0 %v138
    %141 = vmatprep.subr.bf16.mxu0 0
    %142 = vmatpush1.bf16.xpose.msra.mxu0 0
    %143 = vmatprep.subr.bf16.mxu0 0
    %144 = vmatpush1.bf16.xpose.msra.mxu0 0
    %145 = vmatprep.subr.bf16.mxu0 0
    %146 = vmatpush1.bf16.xpose.msra.mxu0 0
    %147 = vmatprep.subr.bf16.mxu0 0
    %148 = vmatpush1.bf16.xpose.msra.mxu0 0
    %149 = vmatprep.subr.bf16.mxu0 0
    %150 = vmatpush1.bf16.xpose.msra.mxu0 0
    %151 = vmatprep.subr.bf16.mxu0 0
    %152 = vmatpush1.bf16.xpose.msra.mxu0 0
    %153 = vmatprep.subr.bf16.mxu0 0
    %154 = vmatpush1.bf16.xpose.msra.mxu0 0
    %155 = vmatprep.subr.bf16.mxu0 0
    %156 = vmatpush1.bf16.xpose.msra.mxu0 0
    %157 = vmatprep.subr.bf16.mxu0 0
    %158 = vmatpush1.bf16.xpose.msra.mxu0 0
    %159 = vmatprep.subr.bf16.mxu0 0
    %160 = vmatpush1.bf16.xpose.msra.mxu0 0
    %161 = vmatprep.subr.bf16.mxu0 0
    %162 = vmatpush1.bf16.xpose.msra.mxu0 0
    %163 = vmatprep.subr.bf16.mxu0 0
    %164 = vmatpush1.bf16.xpose.msra.mxu0 0
    %165 = vmatprep.subr.bf16.mxu0 0
    %166 = vmatpush1.bf16.xpose.msra.mxu0 0
    %167 = vmatprep.subr.bf16.mxu0 0
    %168 = vmatpush1.bf16.xpose.msra.mxu0 0
    %169 = vmatprep.subr.bf16.mxu0 0
    %170 = vmatpush1.bf16.xpose.msra.mxu0 0
    %171 = vmatprep.mubr.bf16.mxu0 0
    %172 = vmatmul.mubr.bf16.gmra.mrb[0].mxu0 %v135
    %v173 = vpop.f32.mrb[0].mxu0
    %v174 = vadd.f32 %v117, %v173
    %v175 = vpop.f32.mrb[0].mxu0
    %v176 = vpop.f32.mrb[0].mxu0
    %v177 = vadd.f32 %v118, %v176
    %v178 = vpop.f32.mrb[0].mxu0
    %179 = vdwg.mxu0
    %vm180 = vcmask 130048
    %v181 = vsel %vm180, %v174, -inf
    %182 = vmax.xlane.f32.xlu0 %v181
    %v183 = vpop.xlane.xlu0 %182
    %v184 = vsel %vm180, %v177, -inf
    %185 = vmax.xlane.f32.xlu0 %v184
    %v186 = vpop.xlane.xlu0 %185
    %v187 = vsub.f32 %v174, %v183
    %v188 = vsub.f32 %v177, %v186
    %v189 = vmul.f32 %v187, 1.442695
    %v190 = vpow.pop %v189
    %v191 = vmul.f32 %v188, 1.442695
    %v192 = vpow.pop %v191
    %v193 = vsel %vm180, %v190, 0.0
    %194 = vadd.xlane.f32.xlu0 %v193
    %v195 = vpop.xlane.xlu0 %194
    %v196 = vsel %vm180, %v192, 0.0
    %197 = vadd.xlane.f32.xlu0 %v196
    %v198 = vpop.xlane.xlu0 %197
    %v199 = vpack.c.bf16 %v192, %v190
    %v200 = vpack.c.bf16 %v116, %v115
    %v202 = vsel %vm180, %v199, 0
    %204 = vmatprep.subr.bf16.mxu0 0
    %205 = vmatpush1.bf16.msra.mxu0 %v200
    %206 = vmatprep.subr.bf16.mxu0 0
    %207 = vmatpush1.bf16.msra.mxu0 0
    %208 = vmatprep.subr.bf16.mxu0 0
    %209 = vmatpush1.bf16.msra.mxu0 0
    %210 = vmatprep.subr.bf16.mxu0 0
    %211 = vmatpush1.bf16.msra.mxu0 0
    %212 = vmatprep.subr.bf16.mxu0 0
    %213 = vmatpush1.bf16.msra.mxu0 0
    %214 = vmatprep.subr.bf16.mxu0 0
    %215 = vmatpush1.bf16.msra.mxu0 0
    %216 = vmatprep.subr.bf16.mxu0 0
    %217 = vmatpush1.bf16.msra.mxu0 0
    %218 = vmatprep.subr.bf16.mxu0 0
    %219 = vmatpush1.bf16.msra.mxu0 0
    %220 = vmatprep.subr.bf16.mxu0 0
    %221 = vmatpush1.bf16.msra.mxu0 0
    %222 = vmatprep.subr.bf16.mxu0 0
    %223 = vmatpush1.bf16.msra.mxu0 0
    %224 = vmatprep.subr.bf16.mxu0 0
    %225 = vmatpush1.bf16.msra.mxu0 0
    %226 = vmatprep.subr.bf16.mxu0 0
    %227 = vmatpush1.bf16.msra.mxu0 0
    %228 = vmatprep.subr.bf16.mxu0 0
    %229 = vmatpush1.bf16.msra.mxu0 0
    %230 = vmatprep.subr.bf16.mxu0 0
    %231 = vmatpush1.bf16.msra.mxu0 0
    %232 = vmatprep.subr.bf16.mxu0 0
    %233 = vmatpush1.bf16.msra.mxu0 0
    %234 = vmatprep.subr.bf16.mxu0 0
    %235 = vmatpush1.bf16.msra.mxu0 0
    %236 = vmatprep.mubr.bf16.mxu0 0
    %237 = vmatmul.mubr.bf16.gmra.mrb[0].mxu0 %v202
    %v238 = vpop.f32.mrb[0].mxu0
    %v239 = vadd.f32 0.0, %v238
    %v240 = vpop.f32.mrb[0].mxu0
    %v241 = vpop.f32.mrb[0].mxu0
    %v242 = vadd.f32 0.0, %v241
    %v243 = vpop.f32.mrb[0].mxu0
    %244 = vdwg.mxu0
    %v245 = vrcp.pop %v195
    %v246 = vrcp.pop %v198
    %v247 = vmul.f32 %v239, %v245
    %v248 = vmul.f32 %v242, %v246
    %v249 = vmax.f32 %v247, 0.0
    %v250 = vmax.f32 %v248, 0.0
    %s251 = sld [smem:[#allocation2 + $0x1]]
    %v252 = vmul.f32 %v249, %v249
    %v253 = vmul.f32 %v250, %v250
    %254 = vadd.xlane.f32.xlu0 %v252
    %v255 = vpop.xlane.xlu0 %254
    %256 = vadd.xlane.f32.xlu0 %v253
    %v257 = vpop.xlane.xlu0 %256
    %v258 = vmax.f32 %v255, 1e-24
    %v259 = vmax.f32 %v257, 1e-24
    %v260 = vrsqrt.pop %v258
    %v261 = vrsqrt.pop %v259
    %v262 = vstv %s251
    %v263 = vmul.f32 %v260, %v262
    %v264 = vmul.f32 %v261, %v262
    %v265 = vmul.f32 %v249, %v263
    %v266 = vmul.f32 %v250, %v264
    %v267 = vpack.c.bf16 %v266, %v265
    %v268 = vmul.f32 %v249, %v260
    %v269 = vmul.f32 %v250, %v261
    %v270 = vpack.c.bf16 %v269, %v268
    %271 = vmatprep.subr.bf16.mxu0 0
    %272 = vmatpush1.bf16.xpose.msra.mxu0 %v270
    %273 = vmatprep.subr.bf16.mxu0 0
    %274 = vmatpush1.bf16.xpose.msra.mxu0 0
    %275 = vmatprep.subr.bf16.mxu0 0
    %276 = vmatpush1.bf16.xpose.msra.mxu0 0
    %277 = vmatprep.subr.bf16.mxu0 0
    %278 = vmatpush1.bf16.xpose.msra.mxu0 0
    %279 = vmatprep.subr.bf16.mxu0 0
    %280 = vmatpush1.bf16.xpose.msra.mxu0 0
    %281 = vmatprep.subr.bf16.mxu0 0
    %282 = vmatpush1.bf16.xpose.msra.mxu0 0
    %283 = vmatprep.subr.bf16.mxu0 0
    %284 = vmatpush1.bf16.xpose.msra.mxu0 0
    %285 = vmatprep.subr.bf16.mxu0 0
    %286 = vmatpush1.bf16.xpose.msra.mxu0 0
    %287 = vmatprep.subr.bf16.mxu0 0
    %288 = vmatpush1.bf16.xpose.msra.mxu0 0
    %289 = vmatprep.subr.bf16.mxu0 0
    %290 = vmatpush1.bf16.xpose.msra.mxu0 0
    %291 = vmatprep.subr.bf16.mxu0 0
    %292 = vmatpush1.bf16.xpose.msra.mxu0 0
    %293 = vmatprep.subr.bf16.mxu0 0
    %294 = vmatpush1.bf16.xpose.msra.mxu0 0
    %295 = vmatprep.subr.bf16.mxu0 0
    %296 = vmatpush1.bf16.xpose.msra.mxu0 0
    %297 = vmatprep.subr.bf16.mxu0 0
    %298 = vmatpush1.bf16.xpose.msra.mxu0 0
    %299 = vmatprep.subr.bf16.mxu0 0
    %300 = vmatpush1.bf16.xpose.msra.mxu0 0
    %301 = vmatprep.subr.bf16.mxu0 0
    %302 = vmatpush1.bf16.xpose.msra.mxu0 0
    %303 = vmatprep.mubr.bf16.mxu0 0
    %304 = vmatmul.mubr.bf16.gmra.mrb[0].mxu0 %v267
    %v305 = vpop.f32.mrb[0].mxu0
    %v306 = vadd.f32 %v117, %v305
    %v307 = vpop.f32.mrb[0].mxu0
    %v308 = vpop.f32.mrb[0].mxu0
    %v309 = vadd.f32 %v118, %v308
    %v310 = vpop.f32.mrb[0].mxu0
    %311 = vdwg.mxu0
    %v312 = vsel %vm180, %v306, -inf
    %313 = vmax.xlane.f32.xlu0 %v312
    %v314 = vpop.xlane.xlu0 %313
    %v315 = vsel %vm180, %v309, -inf
    %316 = vmax.xlane.f32.xlu0 %v315
    %v317 = vpop.xlane.xlu0 %316
    %v318 = vsub.f32 %v306, %v314
    %v319 = vsub.f32 %v309, %v317
    %v320 = vmul.f32 %v318, 1.442695
    %v321 = vpow.pop %v320
    %v322 = vmul.f32 %v319, 1.442695
    %v323 = vpow.pop %v322
    %v324 = vsel %vm180, %v321, 0.0
    %325 = vadd.xlane.f32.xlu0 %v324
    %v326 = vpop.xlane.xlu0 %325
    %v327 = vsel %vm180, %v323, 0.0
    %328 = vadd.xlane.f32.xlu0 %v327
    %v329 = vpop.xlane.xlu0 %328
    %v330 = vpack.c.bf16 %v323, %v321
    %v331 = vpack.c.bf16 %v250, %v249
    %v333 = vsel %vm180, %v330, 0
    %335 = vmatprep.subr.bf16.mxu0 0
    %336 = vmatpush1.bf16.msra.mxu0 %v331
    %337 = vmatprep.subr.bf16.mxu0 0
    %338 = vmatpush1.bf16.msra.mxu0 0
    %339 = vmatprep.subr.bf16.mxu0 0
    %340 = vmatpush1.bf16.msra.mxu0 0
    %341 = vmatprep.subr.bf16.mxu0 0
    %342 = vmatpush1.bf16.msra.mxu0 0
    %343 = vmatprep.subr.bf16.mxu0 0
    %344 = vmatpush1.bf16.msra.mxu0 0
    %345 = vmatprep.subr.bf16.mxu0 0
    %346 = vmatpush1.bf16.msra.mxu0 0
    %347 = vmatprep.subr.bf16.mxu0 0
    %348 = vmatpush1.bf16.msra.mxu0 0
    %349 = vmatprep.subr.bf16.mxu0 0
    %350 = vmatpush1.bf16.msra.mxu0 0
    %351 = vmatprep.subr.bf16.mxu0 0
    %352 = vmatpush1.bf16.msra.mxu0 0
    %353 = vmatprep.subr.bf16.mxu0 0
    %354 = vmatpush1.bf16.msra.mxu0 0
    %355 = vmatprep.subr.bf16.mxu0 0
    %356 = vmatpush1.bf16.msra.mxu0 0
    %357 = vmatprep.subr.bf16.mxu0 0
    %358 = vmatpush1.bf16.msra.mxu0 0
    %359 = vmatprep.subr.bf16.mxu0 0
    %360 = vmatpush1.bf16.msra.mxu0 0
    %361 = vmatprep.subr.bf16.mxu0 0
    %362 = vmatpush1.bf16.msra.mxu0 0
    %363 = vmatprep.subr.bf16.mxu0 0
    %364 = vmatpush1.bf16.msra.mxu0 0
    %365 = vmatprep.subr.bf16.mxu0 0
    %366 = vmatpush1.bf16.msra.mxu0 0
    %367 = vmatprep.mubr.bf16.mxu0 0
    %368 = vmatmul.mubr.bf16.gmra.mrb[0].mxu0 %v333
    %v369 = vpop.f32.mrb[0].mxu0
    %v370 = vadd.f32 0.0, %v369
    %v371 = vpop.f32.mrb[0].mxu0
    %v372 = vpop.f32.mrb[0].mxu0
    %v373 = vadd.f32 0.0, %v372
    %v374 = vpop.f32.mrb[0].mxu0
    %375 = vdwg.mxu0
    %v376 = vrcp.pop %v326
    %v377 = vrcp.pop %v329
    %v378 = vmul.f32 %v370, %v376
    %v379 = vmul.f32 %v373, %v377
    %v380 = vmax.f32 %v378, 0.0
    %v381 = vmax.f32 %v379, 0.0
    %v382 = vpack.c.bf16 %v381, %v380
    %v383 = vld [vmem:[%s4] sm:$0xff]
    %v384 = vld [vmem:[%s4 + $0x8] sm:$0xff]
    %v385 = vld [vmem:[%s4 + $0x10] sm:$0xff]
    %v386 = vld [vmem:[%s4 + $0x18] sm:$0xff]
    %v387 = vld [vmem:[%s4 + $0x20] sm:$0xff]
    %v388 = vld [vmem:[%s4 + $0x28] sm:$0xff]
    %v389 = vld [vmem:[%s4 + $0x30] sm:$0xff]
    %v390 = vld [vmem:[%s4 + $0x38] sm:$0xff]
    %v391 = vld [vmem:[%s4 + $0x40] sm:$0xff]
    %v392 = vld [vmem:[%s4 + $0x48] sm:$0xff]
    %v393 = vld [vmem:[%s4 + $0x50] sm:$0xff]
    %v394 = vld [vmem:[%s4 + $0x58] sm:$0xff]
    %v395 = vld [vmem:[%s4 + $0x60] sm:$0xff]
    %v396 = vld [vmem:[%s4 + $0x68] sm:$0xff]
    %v397 = vld [vmem:[%s4 + $0x70] sm:$0xff]
    %v398 = vld [vmem:[%s4 + $0x78] sm:$0xff]
    %v399 = vpack.c.bf16 %v384, %v383
    %v400 = vpack.c.bf16 %v386, %v385
    %v401 = vpack.c.bf16 %v388, %v387
    %v402 = vpack.c.bf16 %v390, %v389
    %v403 = vpack.c.bf16 %v392, %v391
    %v404 = vpack.c.bf16 %v394, %v393
    %v405 = vpack.c.bf16 %v396, %v395
    %v406 = vpack.c.bf16 %v398, %v397
    %v407 = vld [vmem:[%s5] sm:$0x1]
    %v409 = vlaneseq
    %v410 = vshrl.u32 %v409, 7
    %v411 = vsub.s32 0, %v410
    %v412 = vrot.slane %v407, %v411
    %414 = vmatprep.subr.bf16.mxu0 0
    %415 = vmatpush1.bf16.msra.mxu0 %v399
    %416 = vmatprep.subr.bf16.mxu0 0
    %417 = vmatpush1.bf16.msra.mxu0 %v400
    %418 = vmatprep.subr.bf16.mxu0 0
    %419 = vmatpush1.bf16.msra.mxu0 %v401
    %420 = vmatprep.subr.bf16.mxu0 0
    %421 = vmatpush1.bf16.msra.mxu0 %v402
    %422 = vmatprep.subr.bf16.mxu0 0
    %423 = vmatpush1.bf16.msra.mxu0 %v403
    %424 = vmatprep.subr.bf16.mxu0 0
    %425 = vmatpush1.bf16.msra.mxu0 %v404
    %426 = vmatprep.subr.bf16.mxu0 0
    %427 = vmatpush1.bf16.msra.mxu0 %v405
    %428 = vmatprep.subr.bf16.mxu0 0
    %429 = vmatpush1.bf16.msra.mxu0 %v406
    %430 = vmatprep.subr.bf16.mxu0 0
    %431 = vmatpush1.bf16.msra.mxu0 0
    %432 = vmatprep.subr.bf16.mxu0 0
    %433 = vmatpush1.bf16.msra.mxu0 0
    %434 = vmatprep.subr.bf16.mxu0 0
    %435 = vmatpush1.bf16.msra.mxu0 0
    %436 = vmatprep.subr.bf16.mxu0 0
    %437 = vmatpush1.bf16.msra.mxu0 0
    %438 = vmatprep.subr.bf16.mxu0 0
    %439 = vmatpush1.bf16.msra.mxu0 0
    %440 = vmatprep.subr.bf16.mxu0 0
    %441 = vmatpush1.bf16.msra.mxu0 0
    %442 = vmatprep.subr.bf16.mxu0 0
    %443 = vmatpush1.bf16.msra.mxu0 0
    %444 = vmatprep.subr.bf16.mxu0 0
    %445 = vmatpush1.bf16.msra.mxu0 0
    %446 = vmatprep.mubr.bf16.mxu0 0
    %447 = vmatmul.mubr.bf16.gmra.mrb[0].mxu0 %v382
    %v448 = vpop.f32.mrb[0].mxu0
    %v449 = vadd.f32 %v412, %v448
    %v450 = vpop.f32.mrb[0].mxu0
    %v451 = vpop.f32.mrb[0].mxu0
    %v452 = vadd.f32 %v412, %v451
    %v453 = vpop.f32.mrb[0].mxu0
    %454 = vdwg.mxu0
    %455 = vmax.xlane.f32.xlu0 %v449
    %v456 = vpop.xlane.xlu0 %455
    %457 = vmax.xlane.f32.xlu0 %v452
    %v458 = vpop.xlane.xlu0 %457
    %v459 = vsub.f32 %v449, %v456
    %v460 = vsub.f32 %v452, %v458
    %v461 = vmul.f32 %v459, 1.442695
    %v462 = vpow.pop %v461
    %v463 = vmul.f32 %v460, 1.442695
    %v464 = vpow.pop %v463
    %465 = vadd.xlane.f32.xlu0 %v462
    %v466 = vpop.xlane.xlu0 %465
    %467 = vadd.xlane.f32.xlu0 %v464
    %v468 = vpop.xlane.xlu0 %467
    %v469 = vlog2.pop %v466
    %v470 = vmul.f32 %v469, 0.6931472
    %v471 = vlog2.pop %v468
    %v472 = vmul.f32 %v471, 0.6931472
    %v473 = vsub.f32 %v459, %v470
    %v474 = vsub.f32 %v460, %v472
    %475 = vst [vmem:[%s7] sm:$0xff] %v473
    %476 = vst [vmem:[%s7 + $0x8] sm:$0xff] %v474
    // Predicated region
    $region34: #{agnn_forward.1} parent=1 // pred_check
      _
    $region35: #{agnn_forward.1} parent=1 // pred_check_branch
      %478 = sbr.rel (0) target = $region37
    $region36: #{agnn_forward.1} parent=1 // pred_region
      _
    $region37: #{agnn_forward.1} parent=1 // pred_fallthru
      _
    // Predicated region
    $region38: #{agnn_forward.1} parent=1 // pred_check
      _
    $region39: #{agnn_forward.1} parent=1 // pred_check_branch
      %480 = sbr.rel (0) target = $region41
    $region40: #{agnn_forward.1} parent=1 // pred_region
      _
    $region41: #{agnn_forward.1} parent=1 // pred_fallthru
      _
    %481 = vsyncpa [#allocation3], 1

</llo_original>
